<compile_context>
chip_gen: v7x
topology: tpu7x:2x2x1
jax: 0.10.0
libtpu: 0.0.40
codegen_flags: <defaults>
</compile_context>

<pallas_src>
import math
import functools

import jax
import jax.numpy as jnp
from jax.experimental import pallas as pl
from jax.experimental.pallas import tpu as pltpu


def _round_up(x, m):
    return ((x + m - 1) // m) * m


def _rpe_kernel(emb_t_ref, out_ref, line_ref, *, tq, key_len, num_buckets,
                max_distance, bidirectional, l_pad, h_pad):
    """Relative-position bias for one tile of `tq` query rows.

    emb_t_ref : (h_pad, num_buckets)     VMEM -- transposed, sublane-padded table
    out_ref   : (h_pad, tq * key_len)    VMEM -- heads on sublanes, flat (q,k) on lanes
    line_ref  : (h_pad, l_pad)           VMEM scratch -- bias over distinct d = k - q
    """
    # --- bucket for every distinct relative distance d = k - q in this tile ------
    # lane j of the line corresponds to d = j - (q_start + tq - 1), j in [0, tq+K-1)
    offset = pl.program_id(0) * tq + (tq - 1)
    rel = jax.lax.broadcasted_iota(jnp.int32, (1, l_pad), 1) - offset      # (1, l_pad)

    nb = num_buckets
    if bidirectional:
        nb //= 2
        rel_buckets = (rel > 0).astype(jnp.int32) * nb
        rel = jnp.abs(rel)
    else:
        rel_buckets = jnp.zeros_like(rel)
        rel = -jnp.minimum(rel, jnp.zeros_like(rel))

    max_exact = nb // 2
    is_small = rel < max_exact

    # log-spaced buckets for large distances (HF/T5 formula; trunc-toward-zero cast)
    rel_f = jnp.maximum(rel, 1).astype(jnp.float32)   # clamp only affects unselected entries
    rel_if_large = max_exact + (
        jnp.log(rel_f / max_exact)
        / math.log(max_distance / max_exact)
        * (nb - max_exact)
    ).astype(jnp.int32)
    rel_if_large = jnp.minimum(rel_if_large, nb - 1)

    bucket = rel_buckets + jnp.where(is_small, rel, rel_if_large)          # (1, l_pad) int32

    # --- exact embedding lookup on the small line (VPU select-accumulate) --------
    # Exactly one bucket matches per lane, so the result is bit-exact table values
    # regardless of dtype (no MXU precision-path dependence).
    emb = emb_t_ref[...].astype(jnp.float32)                               # (h_pad, NB)
    line = jnp.zeros((h_pad, l_pad), jnp.float32)
    for b in range(num_buckets):
        line = jnp.where(bucket == b, emb[:, b:b + 1], line)
    line_ref[...] = line.astype(line_ref.dtype)

    # --- expand the line to the (h_pad, tq*key_len) block -------------------------
    # row r (query q_start + r) is the K-wide window of the line starting at tq-1-r.
    # All slices are static; stores are lane-dense when key_len % 128 == 0.
    for r in range(tq):
        s = tq - 1 - r
        out_ref[:, r * key_len:(r + 1) * key_len] = line_ref[:, s:s + key_len]


def _vmem_capacity_bytes():
    try:
        info = pltpu.get_tpu_info()
        cap = getattr(info, "vmem_capacity_bytes", None)
        if cap:
            return int(cap)
    except Exception:
        pass
    return 64 << 20   # conservative fallback: v7x per-TensorCore VMEM


def _step_bytes(tq, key_len, h_pad, itemsize, num_buckets):
    """Per-grid-step VMEM footprint estimate (no one-hot term anymore)."""
    l_pad = _round_up(tq + key_len - 1, 128)
    return (2 * h_pad * tq * key_len * itemsize    # double-buffered output block
            + h_pad * l_pad * itemsize             # line scratch
            + 2 * h_pad * num_buckets * itemsize   # table buffers
            + h_pad * l_pad * 4                    # f32 select temporaries
            + (1 << 20))                           # headroom


def _pick_tq(query_len, key_len, h_pad, itemsize, num_buckets, max_step_bytes,
             unroll_cap=256):
    """Largest q-tile that fits the budget; prefer >=2 grid steps (v7x megacore)."""
    def ok_shape(d):
        return d == query_len or (d * key_len) % 128 == 0

    cands = sorted((d for d in range(1, query_len + 1)
                    if query_len % d == 0 and ok_shape(d)), reverse=True)
    fitting = [d for d in cands
               if d <= unroll_cap
               and _step_bytes(d, key_len, h_pad, itemsize, num_buckets) <= max_step_bytes]
    multi = [d for d in fitting if d <= query_len // 2]   # >=2 grid steps
    if multi:
        return multi[0]
    if fitting:
        return fitting[0]
    return cands[-1]   # smallest legal tile; wrapper asserts the VMEM budget


def t5_relative_position_bias(embedding_table, query_len, key_len, *,
                              bidirectional, num_buckets, max_distance,
                              tq=None, max_step_bytes=None):
    """Returns bias of shape (1, num_heads, query_len, key_len), like the PyTorch module."""
    nb_table, num_heads = embedding_table.shape
    assert nb_table == num_buckets
    nb_eff = num_buckets // 2 if bidirectional else num_buckets
    assert nb_eff // 2 > 0, "num_buckets too small (max_exact would be 0)"

    out_dtype = embedding_table.dtype
    itemsize = jnp.dtype(out_dtype).itemsize
    h_pad = _round_up(max(num_heads, 8), 8)            # unmasked sublane stores

    # transpose + sublane-pad the tiny table once in the wrapper
    emb_t = jnp.pad(embedding_table.T, ((0, h_pad - num_heads), (0, 0)))   # (h_pad, NB)

    capacity = _vmem_capacity_bytes()
    if max_step_bytes is None:
        # ~8 MiB on v7x (64 MiB VMEM/TC), 16 MiB on v5e/v6e (128 MiB)
        max_step_bytes = int(min(max(capacity // 8, 4 << 20), 16 << 20))

    if tq is None:
        tq = _pick_tq(query_len, key_len, h_pad, itemsize, num_buckets, max_step_bytes)
    assert query_len % tq == 0, (query_len, tq)
    assert tq == query_len or (tq * key_len) % 128 == 0, (tq, key_len)

    l_pad = _round_up(tq + key_len - 1, 128)
    flat_block = tq * key_len
    grid = (query_len // tq,)

    step_bytes = _step_bytes(tq, key_len, h_pad, itemsize, num_buckets)
    vmem_limit = int(min(max(4 * step_bytes, 32 << 20),
                         max(int(0.45 * capacity), 2 * step_bytes)))
    vmem_limit = min(vmem_limit, int(0.9 * capacity))
    assert step_bytes <= vmem_limit, (
        f"q-tile tq={tq} needs ~{step_bytes>>20} MiB VMEM > limit {vmem_limit>>20} MiB; "
        f"pass a smaller tq")

    kernel = functools.partial(
        _rpe_kernel, tq=tq, key_len=key_len, num_buckets=num_buckets,
        max_distance=max_distance, bidirectional=bidirectional,
        l_pad=l_pad, h_pad=h_pad)

    out_flat = pl.pallas_call(
        kernel,
        out_shape=jax.ShapeDtypeStruct((h_pad, query_len * key_len), out_dtype),
        grid=grid,
        in_specs=[pl.BlockSpec((h_pad, num_buckets), lambda i: (0, 0))],
        out_specs=pl.BlockSpec((h_pad, flat_block), lambda i: (0, i)),
        scratch_shapes=[pltpu.VMEM((h_pad, l_pad), out_dtype)],
        compiler_params=pltpu.CompilerParams(
            dimension_semantics=("parallel",),
            vmem_limit_bytes=vmem_limit),
    )(emb_t)

    if h_pad != num_heads:
        out_flat = out_flat[:num_heads]
    # (H, Q*K) -> (1, H, Q, K): row-major split of the trailing dim (metadata-only),
    # matching permute([2, 0, 1]).unsqueeze(0) of the (Q, K, H) gather.
    return out_flat.reshape(num_heads, query_len, key_len)[None]


# ----------------------- pure-JAX reference (for verification) -----------------------
def _ref_bias(embedding_table, query_len, key_len, *, bidirectional, num_buckets,
              max_distance):
    ctx = jnp.arange(query_len, dtype=jnp.int32)[:, None]
    mem = jnp.arange(key_len, dtype=jnp.int32)[None, :]
    rel = mem - ctx
    nb = num_buckets
    if bidirectional:
        nb //= 2
        rb = (rel > 0).astype(jnp.int32) * nb
        rel = jnp.abs(rel)
    else:
        rb = jnp.zeros_like(rel)
        rel = -jnp.minimum(rel, 0)
    max_exact = nb // 2
    is_small = rel < max_exact
    large = max_exact + (jnp.log(jnp.maximum(rel, 1).astype(jnp.float32) / max_exact)
                         / math.log(max_distance / max_exact)
                         * (nb - max_exact)).astype(jnp.int32)
    large = jnp.minimum(large, nb - 1)
    bucket = rb + jnp.where(is_small, rel, large)
    vals = embedding_table[bucket]                 # (Q, K, H)
    return jnp.transpose(vals, (2, 0, 1))[None]    # (1, H, Q, K)


if __name__ == "__main__":
    # Module-implied small shapes: num_heads=4, num_buckets=32, max_distance=128,
    # query_seq_length = key_seq_length = 16.
    num_heads = 4
    num_buckets = 32
    max_distance = 128
    query_len = 16
    key_len = 16

    key = jax.random.PRNGKey(0)
    # deterministic init of nn.Embedding(num_buckets, num_heads).weight
    embedding_table = 0.02 * jax.random.normal(
        key, (num_buckets, num_heads), dtype=jnp.float32)

    # 1) bidirectional (encoder self-attention), auto tiling (tq=8 -> 2 parallel grid steps)
    bias = t5_relative_position_bias(
        embedding_table, query_len, key_len,
        bidirectional=True, num_buckets=num_buckets, max_distance=max_distance)
    bias = jax.block_until_ready(bias)
    ref = _ref_bias(embedding_table, query_len, key_len, bidirectional=True,
                    num_buckets=num_buckets, max_distance=max_distance)
    assert bias.shape == (1, num_heads, query_len, key_len), bias.shape
    assert jnp.allclose(bias, ref, atol=1e-6), "bidirectional mismatch vs reference"

    # 2) causal (decoder self-attention), forced single-tile grid (tq = query_len)
    bias_c = t5_relative_position_bias(
        embedding_table, query_len, key_len,
        bidirectional=False, num_buckets=num_buckets, max_distance=max_distance,
        tq=query_len)
    bias_c = jax.block_until_ready(bias_c)
    ref_c = _ref_bias(embedding_table, query_len, key_len, bidirectional=False,
                      num_buckets=num_buckets, max_distance=max_distance)
    assert jnp.allclose(bias_c, ref_c, atol=1e-6), "causal mismatch vs reference"

    # 3) bf16 table: lookup stays exact (select path), different store dtype/packing
    table_bf16 = embedding_table.astype(jnp.bfloat16)
    bias_b = t5_relative_position_bias(
        table_bf16, query_len, key_len,
        bidirectional=True, num_buckets=num_buckets, max_distance=max_distance)
    bias_b = jax.block_until_ready(bias_b)
    ref_b = _ref_bias(table_bf16, query_len, key_len, bidirectional=True,
                      num_buckets=num_buckets, max_distance=max_distance)
    assert bias_b.dtype == jnp.bfloat16
    assert jnp.allclose(bias_b.astype(jnp.float32), ref_b.astype(jnp.float32),
                        atol=1e-6), "bf16 mismatch vs reference"

    print("KERNEL_OK")
</pallas_src>

<mosaic_0001>
module attributes {stable_mosaic.version = 11 : i64} {
  func.func @_rpe_kernel(%arg0: i32, %arg1: memref<8x32xf32, #tpu.memory_space<vmem>>, %arg2: memref<8x128xf32, #tpu.memory_space<vmem>>, %arg3: memref<8x128xf32, #tpu.memory_space<vmem>>) attributes {dimension_semantics = [#tpu.dimension_semantics<parallel>], iteration_bounds = array<i64: 2>, scalar_prefetch = 0 : i64, scratch_operands = 1 : i64, tpu.core_type = #tpu.core_type<tc>, window_params = [{pipeline_mode = #tpu.pipeline_mode<synchronous>, transform_indices = @transform_0, window_bounds = array<i64: 8, 32>}, {transform_indices = @transform_1, window_bounds = array<i64: 8, 128>}]} {
    %c8_i32 = arith.constant 8 : i32
    %0 = arith.muli %arg0, %c8_i32 : i32
    %c7_i32 = arith.constant 7 : i32
    %1 = arith.addi %0, %c7_i32 : i32
    %2 = tpu.iota {dimensions = array<i32: 1>} : vector<1x128xi32>
    %3 = vector.broadcast %1 : i32 to vector<1x128xi32>
    %4 = arith.subi %2, %3 : vector<1x128xi32>
    %c0_i32 = arith.constant 0 : i32
    %5 = vector.broadcast %c0_i32 : i32 to vector<1x128xi32>
    %6 = arith.cmpi sgt, %4, %5 : vector<1x128xi32>
    %7 = arith.extui %6 : vector<1x128xi1> to vector<1x128xi32>
    %c16_i32 = arith.constant 16 : i32
    %8 = vector.broadcast %c16_i32 : i32 to vector<1x128xi32>
    %9 = arith.muli %7, %8 : vector<1x128xi32>
    %10 = math.absi %4 : vector<1x128xi32>
    %c8_i32_0 = arith.constant 8 : i32
    %11 = vector.broadcast %c8_i32_0 : i32 to vector<1x128xi32>
    %12 = arith.cmpi slt, %10, %11 : vector<1x128xi32>
    %c1_i32 = arith.constant 1 : i32
    %13 = vector.broadcast %c1_i32 : i32 to vector<1x128xi32>
    %14 = arith.maxsi %10, %13 : vector<1x128xi32>
    %15 = arith.sitofp %14 : vector<1x128xi32> to vector<1x128xf32>
    %cst = arith.constant 8.000000e+00 : f32
    %16 = vector.broadcast %cst : f32 to vector<1x128xf32>
    %17 = arith.divf %15, %16 : vector<1x128xf32>
    %18 = math.log %17 : vector<1x128xf32>
    %cst_1 = arith.constant 2.77258873 : f32
    %19 = vector.broadcast %cst_1 : f32 to vector<1x128xf32>
    %20 = arith.divf %18, %19 : vector<1x128xf32>
    %cst_2 = arith.constant 8.000000e+00 : f32
    %21 = vector.broadcast %cst_2 : f32 to vector<1x128xf32>
    %22 = arith.mulf %20, %21 : vector<1x128xf32>
    %23 = arith.fptosi %22 : vector<1x128xf32> to vector<1x128xi32>
    %c8_i32_3 = arith.constant 8 : i32
    %24 = vector.broadcast %c8_i32_3 : i32 to vector<1x128xi32>
    %25 = arith.addi %24, %23 : vector<1x128xi32>
    %c15_i32 = arith.constant 15 : i32
    %26 = vector.broadcast %c15_i32 : i32 to vector<1x128xi32>
    %27 = arith.minsi %25, %26 : vector<1x128xi32>
    %28 = arith.select %12, %10, %27 : vector<1x128xi1>, vector<1x128xi32>
    %29 = arith.addi %9, %28 : vector<1x128xi32>
    %c0 = arith.constant 0 : index
    %c0_4 = arith.constant 0 : index
    %30 = vector.load %arg1[%c0, %c0_4] : memref<8x32xf32, #tpu.memory_space<vmem>>, vector<8x32xf32>
    %cst_5 = arith.constant 0.000000e+00 : f32
    %31 = vector.broadcast %cst_5 : f32 to vector<8x128xf32>
    %c0_i32_6 = arith.constant 0 : i32
    %32 = vector.broadcast %c0_i32_6 : i32 to vector<1x128xi32>
    %33 = arith.cmpi eq, %29, %32 : vector<1x128xi32>
    %34 = vector.extract_strided_slice %30 {offsets = [0, 0], sizes = [8, 1], strides = [1, 1]} : vector<8x32xf32> to vector<8x1xf32>
    %35 = vector.shape_cast %33 : vector<1x128xi1> to vector<1x128xi1>
    %36 = vector.broadcast %35 : vector<1x128xi1> to vector<8x128xi1>
    %37 = vector.shape_cast %34 : vector<8x1xf32> to vector<8x1xf32>
    %38 = vector.broadcast %37 : vector<8x1xf32> to vector<8x128xf32>
    %39 = arith.select %36, %38, %31 : vector<8x128xi1>, vector<8x128xf32>
    %c1_i32_7 = arith.constant 1 : i32
    %40 = vector.broadcast %c1_i32_7 : i32 to vector<1x128xi32>
    %41 = arith.cmpi eq, %29, %40 : vector<1x128xi32>
    %42 = vector.extract_strided_slice %30 {offsets = [0, 1], sizes = [8, 1], strides = [1, 1]} : vector<8x32xf32> to vector<8x1xf32>
    %43 = vector.shape_cast %41 : vector<1x128xi1> to vector<1x128xi1>
    %44 = vector.broadcast %43 : vector<1x128xi1> to vector<8x128xi1>
    %45 = vector.shape_cast %42 : vector<8x1xf32> to vector<8x1xf32>
    %46 = vector.broadcast %45 : vector<8x1xf32> to vector<8x128xf32>
    %47 = arith.select %44, %46, %39 : vector<8x128xi1>, vector<8x128xf32>
    %c2_i32 = arith.constant 2 : i32
    %48 = vector.broadcast %c2_i32 : i32 to vector<1x128xi32>
    %49 = arith.cmpi eq, %29, %48 : vector<1x128xi32>
    %50 = vector.extract_strided_slice %30 {offsets = [0, 2], sizes = [8, 1], strides = [1, 1]} : vector<8x32xf32> to vector<8x1xf32>
    %51 = vector.shape_cast %49 : vector<1x128xi1> to vector<1x128xi1>
    %52 = vector.broadcast %51 : vector<1x128xi1> to vector<8x128xi1>
    %53 = vector.shape_cast %50 : vector<8x1xf32> to vector<8x1xf32>
    %54 = vector.broadcast %53 : vector<8x1xf32> to vector<8x128xf32>
    %55 = arith.select %52, %54, %47 : vector<8x128xi1>, vector<8x128xf32>
    %c3_i32 = arith.constant 3 : i32
    %56 = vector.broadcast %c3_i32 : i32 to vector<1x128xi32>
    %57 = arith.cmpi eq, %29, %56 : vector<1x128xi32>
    %58 = vector.extract_strided_slice %30 {offsets = [0, 3], sizes = [8, 1], strides = [1, 1]} : vector<8x32xf32> to vector<8x1xf32>
    %59 = vector.shape_cast %57 : vector<1x128xi1> to vector<1x128xi1>
    %60 = vector.broadcast %59 : vector<1x128xi1> to vector<8x128xi1>
    %61 = vector.shape_cast %58 : vector<8x1xf32> to vector<8x1xf32>
    %62 = vector.broadcast %61 : vector<8x1xf32> to vector<8x128xf32>
    %63 = arith.select %60, %62, %55 : vector<8x128xi1>, vector<8x128xf32>
    %c4_i32 = arith.constant 4 : i32
    %64 = vector.broadcast %c4_i32 : i32 to vector<1x128xi32>
    %65 = arith.cmpi eq, %29, %64 : vector<1x128xi32>
    %66 = vector.extract_strided_slice %30 {offsets = [0, 4], sizes = [8, 1], strides = [1, 1]} : vector<8x32xf32> to vector<8x1xf32>
    %67 = vector.shape_cast %65 : vector<1x128xi1> to vector<1x128xi1>
    %68 = vector.broadcast %67 : vector<1x128xi1> to vector<8x128xi1>
    %69 = vector.shape_cast %66 : vector<8x1xf32> to vector<8x1xf32>
    %70 = vector.broadcast %69 : vector<8x1xf32> to vector<8x128xf32>
    %71 = arith.select %68, %70, %63 : vector<8x128xi1>, vector<8x128xf32>
    %c5_i32 = arith.constant 5 : i32
    %72 = vector.broadcast %c5_i32 : i32 to vector<1x128xi32>
    %73 = arith.cmpi eq, %29, %72 : vector<1x128xi32>
    %74 = vector.extract_strided_slice %30 {offsets = [0, 5], sizes = [8, 1], strides = [1, 1]} : vector<8x32xf32> to vector<8x1xf32>
    %75 = vector.shape_cast %73 : vector<1x128xi1> to vector<1x128xi1>
    %76 = vector.broadcast %75 : vector<1x128xi1> to vector<8x128xi1>
    %77 = vector.shape_cast %74 : vector<8x1xf32> to vector<8x1xf32>
    %78 = vector.broadcast %77 : vector<8x1xf32> to vector<8x128xf32>
    %79 = arith.select %76, %78, %71 : vector<8x128xi1>, vector<8x128xf32>
    %c6_i32 = arith.constant 6 : i32
    %80 = vector.broadcast %c6_i32 : i32 to vector<1x128xi32>
    %81 = arith.cmpi eq, %29, %80 : vector<1x128xi32>
    %82 = vector.extract_strided_slice %30 {offsets = [0, 6], sizes = [8, 1], strides = [1, 1]} : vector<8x32xf32> to vector<8x1xf32>
    %83 = vector.shape_cast %81 : vector<1x128xi1> to vector<1x128xi1>
    %84 = vector.broadcast %83 : vector<1x128xi1> to vector<8x128xi1>
    %85 = vector.shape_cast %82 : vector<8x1xf32> to vector<8x1xf32>
    %86 = vector.broadcast %85 : vector<8x1xf32> to vector<8x128xf32>
    %87 = arith.select %84, %86, %79 : vector<8x128xi1>, vector<8x128xf32>
    %c7_i32_8 = arith.constant 7 : i32
    %88 = vector.broadcast %c7_i32_8 : i32 to vector<1x128xi32>
    %89 = arith.cmpi eq, %29, %88 : vector<1x128xi32>
    %90 = vector.extract_strided_slice %30 {offsets = [0, 7], sizes = [8, 1], strides = [1, 1]} : vector<8x32xf32> to vector<8x1xf32>
    %91 = vector.shape_cast %89 : vector<1x128xi1> to vector<1x128xi1>
    %92 = vector.broadcast %91 : vector<1x128xi1> to vector<8x128xi1>
    %93 = vector.shape_cast %90 : vector<8x1xf32> to vector<8x1xf32>
    %94 = vector.broadcast %93 : vector<8x1xf32> to vector<8x128xf32>
    %95 = arith.select %92, %94, %87 : vector<8x128xi1>, vector<8x128xf32>
    %c8_i32_9 = arith.constant 8 : i32
    %96 = vector.broadcast %c8_i32_9 : i32 to vector<1x128xi32>
    %97 = arith.cmpi eq, %29, %96 : vector<1x128xi32>
    %98 = vector.extract_strided_slice %30 {offsets = [0, 8], sizes = [8, 1], strides = [1, 1]} : vector<8x32xf32> to vector<8x1xf32>
    %99 = vector.shape_cast %97 : vector<1x128xi1> to vector<1x128xi1>
    %100 = vector.broadcast %99 : vector<1x128xi1> to vector<8x128xi1>
    %101 = vector.shape_cast %98 : vector<8x1xf32> to vector<8x1xf32>
    %102 = vector.broadcast %101 : vector<8x1xf32> to vector<8x128xf32>
    %103 = arith.select %100, %102, %95 : vector<8x128xi1>, vector<8x128xf32>
    %c9_i32 = arith.constant 9 : i32
    %104 = vector.broadcast %c9_i32 : i32 to vector<1x128xi32>
    %105 = arith.cmpi eq, %29, %104 : vector<1x128xi32>
    %106 = vector.extract_strided_slice %30 {offsets = [0, 9], sizes = [8, 1], strides = [1, 1]} : vector<8x32xf32> to vector<8x1xf32>
    %107 = vector.shape_cast %105 : vector<1x128xi1> to vector<1x128xi1>
    %108 = vector.broadcast %107 : vector<1x128xi1> to vector<8x128xi1>
    %109 = vector.shape_cast %106 : vector<8x1xf32> to vector<8x1xf32>
    %110 = vector.broadcast %109 : vector<8x1xf32> to vector<8x128xf32>
    %111 = arith.select %108, %110, %103 : vector<8x128xi1>, vector<8x128xf32>
    %c10_i32 = arith.constant 10 : i32
    %112 = vector.broadcast %c10_i32 : i32 to vector<1x128xi32>
    %113 = arith.cmpi eq, %29, %112 : vector<1x128xi32>
    %114 = vector.extract_strided_slice %30 {offsets = [0, 10], sizes = [8, 1], strides = [1, 1]} : vector<8x32xf32> to vector<8x1xf32>
    %115 = vector.shape_cast %113 : vector<1x128xi1> to vector<1x128xi1>
    %116 = vector.broadcast %115 : vector<1x128xi1> to vector<8x128xi1>
    %117 = vector.shape_cast %114 : vector<8x1xf32> to vector<8x1xf32>
    %118 = vector.broadcast %117 : vector<8x1xf32> to vector<8x128xf32>
    %119 = arith.select %116, %118, %111 : vector<8x128xi1>, vector<8x128xf32>
    %c11_i32 = arith.constant 11 : i32
    %120 = vector.broadcast %c11_i32 : i32 to vector<1x128xi32>
    %121 = arith.cmpi eq, %29, %120 : vector<1x128xi32>
    %122 = vector.extract_strided_slice %30 {offsets = [0, 11], sizes = [8, 1], strides = [1, 1]} : vector<8x32xf32> to vector<8x1xf32>
    %123 = vector.shape_cast %121 : vector<1x128xi1> to vector<1x128xi1>
    %124 = vector.broadcast %123 : vector<1x128xi1> to vector<8x128xi1>
    %125 = vector.shape_cast %122 : vector<8x1xf32> to vector<8x1xf32>
    %126 = vector.broadcast %125 : vector<8x1xf32> to vector<8x128xf32>
    %127 = arith.select %124, %126, %119 : vector<8x128xi1>, vector<8x128xf32>
    %c12_i32 = arith.constant 12 : i32
    %128 = vector.broadcast %c12_i32 : i32 to vector<1x128xi32>
    %129 = arith.cmpi eq, %29, %128 : vector<1x128xi32>
    %130 = vector.extract_strided_slice %30 {offsets = [0, 12], sizes = [8, 1], strides = [1, 1]} : vector<8x32xf32> to vector<8x1xf32>
    %131 = vector.shape_cast %129 : vector<1x128xi1> to vector<1x128xi1>
    %132 = vector.broadcast %131 : vector<1x128xi1> to vector<8x128xi1>
    %133 = vector.shape_cast %130 : vector<8x1xf32> to vector<8x1xf32>
    %134 = vector.broadcast %133 : vector<8x1xf32> to vector<8x128xf32>
    %135 = arith.select %132, %134, %127 : vector<8x128xi1>, vector<8x128xf32>
    %c13_i32 = arith.constant 13 : i32
    %136 = vector.broadcast %c13_i32 : i32 to vector<1x128xi32>
    %137 = arith.cmpi eq, %29, %136 : vector<1x128xi32>
    %138 = vector.extract_strided_slice %30 {offsets = [0, 13], sizes = [8, 1], strides = [1, 1]} : vector<8x32xf32> to vector<8x1xf32>
    %139 = vector.shape_cast %137 : vector<1x128xi1> to vector<1x128xi1>
    %140 = vector.broadcast %139 : vector<1x128xi1> to vector<8x128xi1>
    %141 = vector.shape_cast %138 : vector<8x1xf32> to vector<8x1xf32>
    %142 = vector.broadcast %141 : vector<8x1xf32> to vector<8x128xf32>
    %143 = arith.select %140, %142, %135 : vector<8x128xi1>, vector<8x128xf32>
    %c14_i32 = arith.constant 14 : i32
    %144 = vector.broadcast %c14_i32 : i32 to vector<1x128xi32>
    %145 = arith.cmpi eq, %29, %144 : vector<1x128xi32>
    %146 = vector.extract_strided_slice %30 {offsets = [0, 14], sizes = [8, 1], strides = [1, 1]} : vector<8x32xf32> to vector<8x1xf32>
    %147 = vector.shape_cast %145 : vector<1x128xi1> to vector<1x128xi1>
    %148 = vector.broadcast %147 : vector<1x128xi1> to vector<8x128xi1>
    %149 = vector.shape_cast %146 : vector<8x1xf32> to vector<8x1xf32>
    %150 = vector.broadcast %149 : vector<8x1xf32> to vector<8x128xf32>
    %151 = arith.select %148, %150, %143 : vector<8x128xi1>, vector<8x128xf32>
    %c15_i32_10 = arith.constant 15 : i32
    %152 = vector.broadcast %c15_i32_10 : i32 to vector<1x128xi32>
    %153 = arith.cmpi eq, %29, %152 : vector<1x128xi32>
    %154 = vector.extract_strided_slice %30 {offsets = [0, 15], sizes = [8, 1], strides = [1, 1]} : vector<8x32xf32> to vector<8x1xf32>
    %155 = vector.shape_cast %153 : vector<1x128xi1> to vector<1x128xi1>
    %156 = vector.broadcast %155 : vector<1x128xi1> to vector<8x128xi1>
    %157 = vector.shape_cast %154 : vector<8x1xf32> to vector<8x1xf32>
    %158 = vector.broadcast %157 : vector<8x1xf32> to vector<8x128xf32>
    %159 = arith.select %156, %158, %151 : vector<8x128xi1>, vector<8x128xf32>
    %c16_i32_11 = arith.constant 16 : i32
    %160 = vector.broadcast %c16_i32_11 : i32 to vector<1x128xi32>
    %161 = arith.cmpi eq, %29, %160 : vector<1x128xi32>
    %162 = vector.extract_strided_slice %30 {offsets = [0, 16], sizes = [8, 1], strides = [1, 1]} : vector<8x32xf32> to vector<8x1xf32>
    %163 = vector.shape_cast %161 : vector<1x128xi1> to vector<1x128xi1>
    %164 = vector.broadcast %163 : vector<1x128xi1> to vector<8x128xi1>
    %165 = vector.shape_cast %162 : vector<8x1xf32> to vector<8x1xf32>
    %166 = vector.broadcast %165 : vector<8x1xf32> to vector<8x128xf32>
    %167 = arith.select %164, %166, %159 : vector<8x128xi1>, vector<8x128xf32>
    %c17_i32 = arith.constant 17 : i32
    %168 = vector.broadcast %c17_i32 : i32 to vector<1x128xi32>
    %169 = arith.cmpi eq, %29, %168 : vector<1x128xi32>
    %170 = vector.extract_strided_slice %30 {offsets = [0, 17], sizes = [8, 1], strides = [1, 1]} : vector<8x32xf32> to vector<8x1xf32>
    %171 = vector.shape_cast %169 : vector<1x128xi1> to vector<1x128xi1>
    %172 = vector.broadcast %171 : vector<1x128xi1> to vector<8x128xi1>
    %173 = vector.shape_cast %170 : vector<8x1xf32> to vector<8x1xf32>
    %174 = vector.broadcast %173 : vector<8x1xf32> to vector<8x128xf32>
    %175 = arith.select %172, %174, %167 : vector<8x128xi1>, vector<8x128xf32>
    %c18_i32 = arith.constant 18 : i32
    %176 = vector.broadcast %c18_i32 : i32 to vector<1x128xi32>
    %177 = arith.cmpi eq, %29, %176 : vector<1x128xi32>
    %178 = vector.extract_strided_slice %30 {offsets = [0, 18], sizes = [8, 1], strides = [1, 1]} : vector<8x32xf32> to vector<8x1xf32>
    %179 = vector.shape_cast %177 : vector<1x128xi1> to vector<1x128xi1>
    %180 = vector.broadcast %179 : vector<1x128xi1> to vector<8x128xi1>
    %181 = vector.shape_cast %178 : vector<8x1xf32> to vector<8x1xf32>
    %182 = vector.broadcast %181 : vector<8x1xf32> to vector<8x128xf32>
    %183 = arith.select %180, %182, %175 : vector<8x128xi1>, vector<8x128xf32>
    %c19_i32 = arith.constant 19 : i32
    %184 = vector.broadcast %c19_i32 : i32 to vector<1x128xi32>
    %185 = arith.cmpi eq, %29, %184 : vector<1x128xi32>
    %186 = vector.extract_strided_slice %30 {offsets = [0, 19], sizes = [8, 1], strides = [1, 1]} : vector<8x32xf32> to vector<8x1xf32>
    %187 = vector.shape_cast %185 : vector<1x128xi1> to vector<1x128xi1>
    %188 = vector.broadcast %187 : vector<1x128xi1> to vector<8x128xi1>
    %189 = vector.shape_cast %186 : vector<8x1xf32> to vector<8x1xf32>
    %190 = vector.broadcast %189 : vector<8x1xf32> to vector<8x128xf32>
    %191 = arith.select %188, %190, %183 : vector<8x128xi1>, vector<8x128xf32>
    %c20_i32 = arith.constant 20 : i32
    %192 = vector.broadcast %c20_i32 : i32 to vector<1x128xi32>
    %193 = arith.cmpi eq, %29, %192 : vector<1x128xi32>
    %194 = vector.extract_strided_slice %30 {offsets = [0, 20], sizes = [8, 1], strides = [1, 1]} : vector<8x32xf32> to vector<8x1xf32>
    %195 = vector.shape_cast %193 : vector<1x128xi1> to vector<1x128xi1>
    %196 = vector.broadcast %195 : vector<1x128xi1> to vector<8x128xi1>
    %197 = vector.shape_cast %194 : vector<8x1xf32> to vector<8x1xf32>
    %198 = vector.broadcast %197 : vector<8x1xf32> to vector<8x128xf32>
    %199 = arith.select %196, %198, %191 : vector<8x128xi1>, vector<8x128xf32>
    %c21_i32 = arith.constant 21 : i32
    %200 = vector.broadcast %c21_i32 : i32 to vector<1x128xi32>
    %201 = arith.cmpi eq, %29, %200 : vector<1x128xi32>
    %202 = vector.extract_strided_slice %30 {offsets = [0, 21], sizes = [8, 1], strides = [1, 1]} : vector<8x32xf32> to vector<8x1xf32>
    %203 = vector.shape_cast %201 : vector<1x128xi1> to vector<1x128xi1>
    %204 = vector.broadcast %203 : vector<1x128xi1> to vector<8x128xi1>
    %205 = vector.shape_cast %202 : vector<8x1xf32> to vector<8x1xf32>
    %206 = vector.broadcast %205 : vector<8x1xf32> to vector<8x128xf32>
    %207 = arith.select %204, %206, %199 : vector<8x128xi1>, vector<8x128xf32>
    %c22_i32 = arith.constant 22 : i32
    %208 = vector.broadcast %c22_i32 : i32 to vector<1x128xi32>
    %209 = arith.cmpi eq, %29, %208 : vector<1x128xi32>
    %210 = vector.extract_strided_slice %30 {offsets = [0, 22], sizes = [8, 1], strides = [1, 1]} : vector<8x32xf32> to vector<8x1xf32>
    %211 = vector.shape_cast %209 : vector<1x128xi1> to vector<1x128xi1>
    %212 = vector.broadcast %211 : vector<1x128xi1> to vector<8x128xi1>
    %213 = vector.shape_cast %210 : vector<8x1xf32> to vector<8x1xf32>
    %214 = vector.broadcast %213 : vector<8x1xf32> to vector<8x128xf32>
    %215 = arith.select %212, %214, %207 : vector<8x128xi1>, vector<8x128xf32>
    %c23_i32 = arith.constant 23 : i32
    %216 = vector.broadcast %c23_i32 : i32 to vector<1x128xi32>
    %217 = arith.cmpi eq, %29, %216 : vector<1x128xi32>
    %218 = vector.extract_strided_slice %30 {offsets = [0, 23], sizes = [8, 1], strides = [1, 1]} : vector<8x32xf32> to vector<8x1xf32>
    %219 = vector.shape_cast %217 : vector<1x128xi1> to vector<1x128xi1>
    %220 = vector.broadcast %219 : vector<1x128xi1> to vector<8x128xi1>
    %221 = vector.shape_cast %218 : vector<8x1xf32> to vector<8x1xf32>
    %222 = vector.broadcast %221 : vector<8x1xf32> to vector<8x128xf32>
    %223 = arith.select %220, %222, %215 : vector<8x128xi1>, vector<8x128xf32>
    %c24_i32 = arith.constant 24 : i32
    %224 = vector.broadcast %c24_i32 : i32 to vector<1x128xi32>
    %225 = arith.cmpi eq, %29, %224 : vector<1x128xi32>
    %226 = vector.extract_strided_slice %30 {offsets = [0, 24], sizes = [8, 1], strides = [1, 1]} : vector<8x32xf32> to vector<8x1xf32>
    %227 = vector.shape_cast %225 : vector<1x128xi1> to vector<1x128xi1>
    %228 = vector.broadcast %227 : vector<1x128xi1> to vector<8x128xi1>
    %229 = vector.shape_cast %226 : vector<8x1xf32> to vector<8x1xf32>
    %230 = vector.broadcast %229 : vector<8x1xf32> to vector<8x128xf32>
    %231 = arith.select %228, %230, %223 : vector<8x128xi1>, vector<8x128xf32>
    %c25_i32 = arith.constant 25 : i32
    %232 = vector.broadcast %c25_i32 : i32 to vector<1x128xi32>
    %233 = arith.cmpi eq, %29, %232 : vector<1x128xi32>
    %234 = vector.extract_strided_slice %30 {offsets = [0, 25], sizes = [8, 1], strides = [1, 1]} : vector<8x32xf32> to vector<8x1xf32>
    %235 = vector.shape_cast %233 : vector<1x128xi1> to vector<1x128xi1>
    %236 = vector.broadcast %235 : vector<1x128xi1> to vector<8x128xi1>
    %237 = vector.shape_cast %234 : vector<8x1xf32> to vector<8x1xf32>
    %238 = vector.broadcast %237 : vector<8x1xf32> to vector<8x128xf32>
    %239 = arith.select %236, %238, %231 : vector<8x128xi1>, vector<8x128xf32>
    %c26_i32 = arith.constant 26 : i32
    %240 = vector.broadcast %c26_i32 : i32 to vector<1x128xi32>
    %241 = arith.cmpi eq, %29, %240 : vector<1x128xi32>
    %242 = vector.extract_strided_slice %30 {offsets = [0, 26], sizes = [8, 1], strides = [1, 1]} : vector<8x32xf32> to vector<8x1xf32>
    %243 = vector.shape_cast %241 : vector<1x128xi1> to vector<1x128xi1>
    %244 = vector.broadcast %243 : vector<1x128xi1> to vector<8x128xi1>
    %245 = vector.shape_cast %242 : vector<8x1xf32> to vector<8x1xf32>
    %246 = vector.broadcast %245 : vector<8x1xf32> to vector<8x128xf32>
    %247 = arith.select %244, %246, %239 : vector<8x128xi1>, vector<8x128xf32>
    %c27_i32 = arith.constant 27 : i32
    %248 = vector.broadcast %c27_i32 : i32 to vector<1x128xi32>
    %249 = arith.cmpi eq, %29, %248 : vector<1x128xi32>
    %250 = vector.extract_strided_slice %30 {offsets = [0, 27], sizes = [8, 1], strides = [1, 1]} : vector<8x32xf32> to vector<8x1xf32>
    %251 = vector.shape_cast %249 : vector<1x128xi1> to vector<1x128xi1>
    %252 = vector.broadcast %251 : vector<1x128xi1> to vector<8x128xi1>
    %253 = vector.shape_cast %250 : vector<8x1xf32> to vector<8x1xf32>
    %254 = vector.broadcast %253 : vector<8x1xf32> to vector<8x128xf32>
    %255 = arith.select %252, %254, %247 : vector<8x128xi1>, vector<8x128xf32>
    %c28_i32 = arith.constant 28 : i32
    %256 = vector.broadcast %c28_i32 : i32 to vector<1x128xi32>
    %257 = arith.cmpi eq, %29, %256 : vector<1x128xi32>
    %258 = vector.extract_strided_slice %30 {offsets = [0, 28], sizes = [8, 1], strides = [1, 1]} : vector<8x32xf32> to vector<8x1xf32>
    %259 = vector.shape_cast %257 : vector<1x128xi1> to vector<1x128xi1>
    %260 = vector.broadcast %259 : vector<1x128xi1> to vector<8x128xi1>
    %261 = vector.shape_cast %258 : vector<8x1xf32> to vector<8x1xf32>
    %262 = vector.broadcast %261 : vector<8x1xf32> to vector<8x128xf32>
    %263 = arith.select %260, %262, %255 : vector<8x128xi1>, vector<8x128xf32>
    %c29_i32 = arith.constant 29 : i32
    %264 = vector.broadcast %c29_i32 : i32 to vector<1x128xi32>
    %265 = arith.cmpi eq, %29, %264 : vector<1x128xi32>
    %266 = vector.extract_strided_slice %30 {offsets = [0, 29], sizes = [8, 1], strides = [1, 1]} : vector<8x32xf32> to vector<8x1xf32>
    %267 = vector.shape_cast %265 : vector<1x128xi1> to vector<1x128xi1>
    %268 = vector.broadcast %267 : vector<1x128xi1> to vector<8x128xi1>
    %269 = vector.shape_cast %266 : vector<8x1xf32> to vector<8x1xf32>
    %270 = vector.broadcast %269 : vector<8x1xf32> to vector<8x128xf32>
    %271 = arith.select %268, %270, %263 : vector<8x128xi1>, vector<8x128xf32>
    %c30_i32 = arith.constant 30 : i32
    %272 = vector.broadcast %c30_i32 : i32 to vector<1x128xi32>
    %273 = arith.cmpi eq, %29, %272 : vector<1x128xi32>
    %274 = vector.extract_strided_slice %30 {offsets = [0, 30], sizes = [8, 1], strides = [1, 1]} : vector<8x32xf32> to vector<8x1xf32>
    %275 = vector.shape_cast %273 : vector<1x128xi1> to vector<1x128xi1>
    %276 = vector.broadcast %275 : vector<1x128xi1> to vector<8x128xi1>
    %277 = vector.shape_cast %274 : vector<8x1xf32> to vector<8x1xf32>
    %278 = vector.broadcast %277 : vector<8x1xf32> to vector<8x128xf32>
    %279 = arith.select %276, %278, %271 : vector<8x128xi1>, vector<8x128xf32>
    %c31_i32 = arith.constant 31 : i32
    %280 = vector.broadcast %c31_i32 : i32 to vector<1x128xi32>
    %281 = arith.cmpi eq, %29, %280 : vector<1x128xi32>
    %282 = vector.extract_strided_slice %30 {offsets = [0, 31], sizes = [8, 1], strides = [1, 1]} : vector<8x32xf32> to vector<8x1xf32>
    %283 = vector.shape_cast %281 : vector<1x128xi1> to vector<1x128xi1>
    %284 = vector.broadcast %283 : vector<1x128xi1> to vector<8x128xi1>
    %285 = vector.shape_cast %282 : vector<8x1xf32> to vector<8x1xf32>
    %286 = vector.broadcast %285 : vector<8x1xf32> to vector<8x128xf32>
    %287 = arith.select %284, %286, %279 : vector<8x128xi1>, vector<8x128xf32>
    %c0_12 = arith.constant 0 : index
    %c0_13 = arith.constant 0 : index
    %288 = vector.load %arg3[%c0_12, %c0_13] : memref<8x128xf32, #tpu.memory_space<vmem>>, vector<8x128xf32>
    tpu.vector_store %arg3[%c0_12, %c0_13], %287 {strides = array<i32>} : memref<8x128xf32, #tpu.memory_space<vmem>>, vector<8x128xf32>,
    %c0_14 = arith.constant 0 : index
    %c7 = arith.constant 7 : index
    %289 = vector.load %arg3[%c0_14, %c7] : memref<8x128xf32, #tpu.memory_space<vmem>>, vector<8x16xf32>
    %c0_15 = arith.constant 0 : index
    %c0_16 = arith.constant 0 : index
    %290 = vector.load %arg2[%c0_15, %c0_16] : memref<8x128xf32, #tpu.memory_space<vmem>>, vector<8x16xf32>
    tpu.vector_store %arg2[%c0_15, %c0_16], %289 {strides = array<i32>} : memref<8x128xf32, #tpu.memory_space<vmem>>, vector<8x16xf32>,
    %c0_17 = arith.constant 0 : index
    %c6 = arith.constant 6 : index
    %291 = vector.load %arg3[%c0_17, %c6] : memref<8x128xf32, #tpu.memory_space<vmem>>, vector<8x16xf32>
    %c0_18 = arith.constant 0 : index
    %c16 = arith.constant 16 : index
    %292 = vector.load %arg2[%c0_18, %c16] : memref<8x128xf32, #tpu.memory_space<vmem>>, vector<8x16xf32>
    tpu.vector_store %arg2[%c0_18, %c16], %291 {strides = array<i32>} : memref<8x128xf32, #tpu.memory_space<vmem>>, vector<8x16xf32>,
    %c0_19 = arith.constant 0 : index
    %c5 = arith.constant 5 : index
    %293 = vector.load %arg3[%c0_19, %c5] : memref<8x128xf32, #tpu.memory_space<vmem>>, vector<8x16xf32>
    %c0_20 = arith.constant 0 : index
    %c32 = arith.constant 32 : index
    %294 = vector.load %arg2[%c0_20, %c32] : memref<8x128xf32, #tpu.memory_space<vmem>>, vector<8x16xf32>
    tpu.vector_store %arg2[%c0_20, %c32], %293 {strides = array<i32>} : memref<8x128xf32, #tpu.memory_space<vmem>>, vector<8x16xf32>,
    %c0_21 = arith.constant 0 : index
    %c4 = arith.constant 4 : index
    %295 = vector.load %arg3[%c0_21, %c4] : memref<8x128xf32, #tpu.memory_space<vmem>>, vector<8x16xf32>
    %c0_22 = arith.constant 0 : index
    %c48 = arith.constant 48 : index
    %296 = vector.load %arg2[%c0_22, %c48] : memref<8x128xf32, #tpu.memory_space<vmem>>, vector<8x16xf32>
    tpu.vector_store %arg2[%c0_22, %c48], %295 {strides = array<i32>} : memref<8x128xf32, #tpu.memory_space<vmem>>, vector<8x16xf32>,
    %c0_23 = arith.constant 0 : index
    %c3 = arith.constant 3 : index
    %297 = vector.load %arg3[%c0_23, %c3] : memref<8x128xf32, #tpu.memory_space<vmem>>, vector<8x16xf32>
    %c0_24 = arith.constant 0 : index
    %c64 = arith.constant 64 : index
    %298 = vector.load %arg2[%c0_24, %c64] : memref<8x128xf32, #tpu.memory_space<vmem>>, vector<8x16xf32>
    tpu.vector_store %arg2[%c0_24, %c64], %297 {strides = array<i32>} : memref<8x128xf32, #tpu.memory_space<vmem>>, vector<8x16xf32>,
    %c0_25 = arith.constant 0 : index
    %c2 = arith.constant 2 : index
    %299 = vector.load %arg3[%c0_25, %c2] : memref<8x128xf32, #tpu.memory_space<vmem>>, vector<8x16xf32>
    %c0_26 = arith.constant 0 : index
    %c80 = arith.constant 80 : index
    %300 = vector.load %arg2[%c0_26, %c80] : memref<8x128xf32, #tpu.memory_space<vmem>>, vector<8x16xf32>
    tpu.vector_store %arg2[%c0_26, %c80], %299 {strides = array<i32>} : memref<8x128xf32, #tpu.memory_space<vmem>>, vector<8x16xf32>,
    %c0_27 = arith.constant 0 : index
    %c1 = arith.constant 1 : index
    %301 = vector.load %arg3[%c0_27, %c1] : memref<8x128xf32, #tpu.memory_space<vmem>>, vector<8x16xf32>
    %c0_28 = arith.constant 0 : index
    %c96 = arith.constant 96 : index
    %302 = vector.load %arg2[%c0_28, %c96] : memref<8x128xf32, #tpu.memory_space<vmem>>, vector<8x16xf32>
    tpu.vector_store %arg2[%c0_28, %c96], %301 {strides = array<i32>} : memref<8x128xf32, #tpu.memory_space<vmem>>, vector<8x16xf32>,
    %c0_29 = arith.constant 0 : index
    %c0_30 = arith.constant 0 : index
    %303 = vector.load %arg3[%c0_29, %c0_30] : memref<8x128xf32, #tpu.memory_space<vmem>>, vector<8x16xf32>
    %c0_31 = arith.constant 0 : index
    %c112 = arith.constant 112 : index
    %304 = vector.load %arg2[%c0_31, %c112] : memref<8x128xf32, #tpu.memory_space<vmem>>, vector<8x16xf32>
    tpu.vector_store %arg2[%c0_31, %c112], %303 {strides = array<i32>} : memref<8x128xf32, #tpu.memory_space<vmem>>, vector<8x16xf32>,
    return
  }
  func.func @transform_0(%arg0: i32) -> (i32, i32) {
    %c0_i32 = arith.constant 0 : i32
    %c0_i32_0 = arith.constant 0 : i32
    %c0_i32_1 = arith.constant 0 : i32
    return %c0_i32, %c0_i32_0 : i32, i32
  }
  func.func @transform_1(%arg0: i32) -> (i32, i32) {
    %c0_i32 = arith.constant 0 : i32
    %c0_i32_0 = arith.constant 0 : i32
    return %c0_i32, %arg0 : i32, i32
  }
}

</mosaic_0001>

<llo_original>
// kernel: tpu_custom_call.1
$region0: #{tpu_custom_call.1}
  #allocation0 [shape = 'u32[]', space=smem, size = 0x4, offset = 0x4, fixed_abs, tag = 'smem constant byte address 0x4 - core index']
  #allocation1 [shape = 'u32[144,128]{1,0:T(1,128)}', space=vmem, size = 0x12000, scoped, tag = 'internal scratch']
  #allocation2 [shape = 'f32[8,128]{1,0:T(8,128)}', space=vmem, size = 0x1000, scoped, tag = 'scratch operand']
  %s0 = inlined_call_operand.hbm [shape: f32[8,32], index: 0, kind: input, shape index: {}]
  %s1 = inlined_call_operand.hbm [shape: f32[8,256], index: 1, kind: output, shape index: {}]
  %s2 = sld [smem:[#allocation0]]
  $region41: #{tpu_custom_call.1} parent=0
    _
  %s4 = ssub.s32 1, %s2
  %s5 = scalar_select 0, %s4, %s2
  $region1: #{tpu_custom_call.1} parent=0
    #allocation3 [shape = 'u8[4096]{0}', space=vmem, size = 0x1000, scoped, tag = 'input window, operand 0, single buffered']
    #allocation4 [shape = 's32[2]{0}', space=sflag, size = 0x8, scoped, tag = 'scoped memory for tpu_custom_call.1']
    #allocation5 [shape = 's32[2]{0}', space=sflag, size = 0x8, scoped, tag = 'scoped memory for tpu_custom_call.1']
    #allocation6 [shape = 'u8[8192]{0}', space=vmem, size = 0x2000, scoped, tag = 'output window, operand 0']
    %6 = vsyncpa [#allocation4], 0
    %7 = vsyncpa [#allocation5], 0
    %s8 = scalar_lea.sflag [#allocation5], 1
    %9 = vsyncpa %s8, 0
    loop: start=0, step=1, limit=4
    $region2: #{tpu_custom_call.1} parent=1 // loop_pre_header
      _
    $region3: #{tpu_custom_call.1} parent=1 // loop_header
      %s11 = sphi 0, %s15
      %p12 = scmp.ge.s32.totalorder %s11, 4
      %s19 = sphi 0, %s19
      %s21 = sphi 0, %s19
      %s22 = sphi 0, %s21
      %s36 = sphi 0, %s22
      %s42 = sphi 0, %s44
      %s45 = sphi 0, %s42
      %s46 = sphi 0, %s45
      %s62 = sphi 0, %s46
    $region4: #{tpu_custom_call.1} parent=1 // loop_header_branch
      %14 = sbr.rel (%p12) target = $region8
    $region5: #{tpu_custom_call.1} parent=1 // loop_body
      %s16 = ssub.s32 %s11, 1
      %s17 = ssub.s32 %s11, 2
      %s18 = sadd.s32 %s11, 1
      %s20 = sadd.s32 %s19, 1
      %p23 = scmp.eq.s32.totalorder %s11, 1
      %p24 = scmp.ne.s32.totalorder %s19, %s21
      %p25 = scmp.eq.s32.totalorder %s11, 0
      %p26 = por %p24, %p25
      %p27 = scmp.ne.s32.totalorder %s19, %s21
      %p28 = scmp.eq.s32.totalorder %s16, 1
      %p29 = por %p27, %p28
      %p30 = scmp.ne.s32.totalorder %s21, %s22
      %p31 = scmp.eq.s32.totalorder %s16, 0
      %p32 = por %p30, %p31
      %p33 = scmp.ne.s32.totalorder %s21, %s22
      %p34 = scmp.eq.s32.totalorder %s17, 1
      %p35 = por %p33, %p34
      %p37 = scmp.ne.s32.totalorder %s22, %s36
      %p38 = scmp.eq.s32.totalorder %s17, 0
      %p39 = por %p37, %p38
      %s40 = ssub.s32 %s11, %s18
      %p41 = scmp.eq.s32.totalorder %s40, 0
      %s43 = sadd.s32 %s42, 1
      %s44 = scalar_select %p41, %s42, %s43
      %p47 = pneg %p41
      %p48 = scmp.eq.s32.totalorder %s11, 1
      %p49 = por %p47, %p48
      %p50 = scmp.ne.s32.totalorder %s42, %s45
      %p51 = scmp.eq.s32.totalorder %s11, 0
      %p52 = por %p50, %p51
      %p53 = scmp.ne.s32.totalorder %s42, %s45
      %p54 = scmp.eq.s32.totalorder %s16, 1
      %p55 = por %p53, %p54
      %p56 = scmp.ne.s32.totalorder %s45, %s46
      %p57 = scmp.eq.s32.totalorder %s16, 0
      %p58 = por %p56, %p57
      %p59 = scmp.ne.s32.totalorder %s45, %s46
      %p60 = scmp.eq.s32.totalorder %s17, 1
      %p61 = por %p59, %p60
      %p63 = scmp.ne.s32.totalorder %s46, %s62
      %p64 = scmp.eq.s32.totalorder %s17, 0
      %p65 = por %p63, %p64
      %p66 = scmp.le.s32.totalorder 1, %s11
      %p67 = scmp.lt.s32.totalorder %s11, 3
      %p68 = pnand %p66, %p67
      %p69 = pneg %p68
      // Predicated region
      $region9: #{tpu_custom_call.1} parent=5 // pred_check
        _
      $region10: #{tpu_custom_call.1} parent=5 // pred_check_branch
        %71 = sbr.rel (%p68) target = $region12
      $region11: #{tpu_custom_call.1} parent=5 // pred_region
        %s72 = ssub.s32 %s11, 1
        // Predicated region
        $region13: #{tpu_custom_call.1} parent=11 // pred_check
          %p73 = pneg %p32
        $region14: #{tpu_custom_call.1} parent=11 // pred_check_branch
          %75 = sbr.rel (%p73) target = $region16
        $region15: #{tpu_custom_call.1} parent=11 // pred_region
          %s77 = ssub.s32 128, 128
          %78 = vsyncadd [#allocation4], %s77
          %s80 = sshll.u32 [#allocation3], 4
          %s81 = int_to_ptr.vmem [resolvable:$true] %s80
          %83 = dma.hbm_to_vmem [thread:$0]  %s0, 128, %s81, [#allocation4]
        $region16: #{tpu_custom_call.1} parent=11 // pred_fallthru
          _
      $region12: #{tpu_custom_call.1} parent=5 // pred_fallthru
        _
      %p84 = scmp.lt.s32.totalorder %s11, 2
      // Predicated region
      $region17: #{tpu_custom_call.1} parent=5 // pred_check
        %p85 = pneg %p84
      $region18: #{tpu_custom_call.1} parent=5 // pred_check_branch
        %87 = sbr.rel (%p85) target = $region20
      $region19: #{tpu_custom_call.1} parent=5 // pred_region
        _
      $region20: #{tpu_custom_call.1} parent=5 // pred_fallthru
        _
      %p88 = scmp.le.s32.totalorder 1, %s11
      %p89 = scmp.lt.s32.totalorder %s11, 3
      %p90 = pnand %p88, %p89
      %p91 = pneg %p90
      // Predicated region
      $region21: #{tpu_custom_call.1} parent=5 // pred_check
        _
      $region22: #{tpu_custom_call.1} parent=5 // pred_check_branch
        %93 = sbr.rel (%p90) target = $region24
      $region23: #{tpu_custom_call.1} parent=5 // pred_region
        %s94 = ssub.s32 %s11, 1
        // Predicated region
        $region25: #{tpu_custom_call.1} parent=23 // pred_check
          %p95 = pneg %p32
        $region26: #{tpu_custom_call.1} parent=23 // pred_check_branch
          %97 = sbr.rel (%p95) target = $region28
        $region27: #{tpu_custom_call.1} parent=23 // pred_region
          %98 = dma.done [#allocation4], 128
        $region28: #{tpu_custom_call.1} parent=23 // pred_fallthru
          _
        %p99 = pneg %p32
        %p100 = pneg %p29
        %p101 = pneg %p58
        %p102 = pneg %p55
        %s103 = sand.u32 %s45, 1
        %s104 = scalar_lea.sflag [#allocation5], %s103
        %s105 = sand.u32 %s45, 1
        %s106 = smul.addr %s105, 8
        %s107 = scalar_lea.vmem [#allocation6], %s106
        %s108 = smul.u32 %s16, 8
        %s109 = sadd.s32 %s108, 7
        %v110 = vlaneseq
        %v111 = vand.u32 %v110, 127
        %v112 = vstv %s109
        %v113 = vsub.s32 %v111, %v112
        %vm114 = vcmp.gt.s32.totalorder %v113, 0
        %v115 = vsel %vm114, 1, 0
        %v116 = vmul.u32 %v115, 16
        %vm117 = vcmp.lt.s32.totalorder %v113, 0
        %v118 = vsub.s32 0, %v113
        %v119 = vsel %vm117, %v118, %v113
        %vm120 = vcmp.lt.s32.totalorder %v119, 8
        %vm121 = vcmp.gt.s32.totalorder %v119, 1
        %v122 = vsel %vm121, %v119, 1
        %v123 = vcvt.s32.f32 %v122
        %v124 = vrcp.pop 8.0
        %v125 = vmul.f32 %v123, %v124
        %v126 = vlog2.pop %v125
        %v127 = vmul.f32 %v126, 0.6931472
        %v128 = vrcp.pop 2.7725887
        %v129 = vmul.f32 %v127, %v128
        %v130 = vmul.f32 %v129, 8.0
        %v131 = vcvt.f32.s32.to.zero.pseudo %v130
        %v132 = vadd.s32 %v131, 8
        %vm133 = vcmp.lt.s32.totalorder %v132, 15
        %v134 = vsel %vm133, %v132, 15
        %v135 = vsel %vm120, %v119, %v134
        %v136 = vadd.s32 %v116, %v135
        %v137 = vld [vmem:[#allocation3] sm:$0xff]
        %vm138 = vcmp.eq.s32.totalorder %v136, 0
        %v139 = vsel %vm138, 1, 0
        %vm140 = vcmp.eq.s32.totalorder %v139, 1
        %142 = vset.pattern.permute.xlu0 0
        %143 = vperm.xlu0 %142, %v137
        %v144 = vpop.permute.xlu0 %143
        %v146 = vsel %vm140, %v144, 0.0
        %vm147 = vcmp.eq.s32.totalorder %v136, 1
        %v148 = vsel %vm147, 1, 0
        %vm149 = vcmp.eq.s32.totalorder %v148, 1
        %150 = vset.pattern.permute.xlu0 1
        %151 = vperm.xlu0 %150, %v137
        %v152 = vpop.permute.xlu0 %151
        %v154 = vsel %vm149, %v152, %v146
        %vm155 = vcmp.eq.s32.totalorder %v136, 2
        %v156 = vsel %vm155, 1, 0
        %vm157 = vcmp.eq.s32.totalorder %v156, 1
        %158 = vset.pattern.permute.xlu0 2
        %159 = vperm.xlu0 %158, %v137
        %v160 = vpop.permute.xlu0 %159
        %v162 = vsel %vm157, %v160, %v154
        %vm163 = vcmp.eq.s32.totalorder %v136, 3
        %v164 = vsel %vm163, 1, 0
        %vm165 = vcmp.eq.s32.totalorder %v164, 1
        %166 = vset.pattern.permute.xlu0 3
        %167 = vperm.xlu0 %166, %v137
        %v168 = vpop.permute.xlu0 %167
        %v170 = vsel %vm165, %v168, %v162
        %vm171 = vcmp.eq.s32.totalorder %v136, 4
        %v172 = vsel %vm171, 1, 0
        %vm173 = vcmp.eq.s32.totalorder %v172, 1
        %174 = vset.pattern.permute.xlu0 4
        %175 = vperm.xlu0 %174, %v137
        %v176 = vpop.permute.xlu0 %175
        %v178 = vsel %vm173, %v176, %v170
        %vm179 = vcmp.eq.s32.totalorder %v136, 5
        %v180 = vsel %vm179, 1, 0
        %vm181 = vcmp.eq.s32.totalorder %v180, 1
        %182 = vset.pattern.permute.xlu0 5
        %183 = vperm.xlu0 %182, %v137
        %v184 = vpop.permute.xlu0 %183
        %v186 = vsel %vm181, %v184, %v178
        %vm187 = vcmp.eq.s32.totalorder %v136, 6
        %v188 = vsel %vm187, 1, 0
        %vm189 = vcmp.eq.s32.totalorder %v188, 1
        %190 = vset.pattern.permute.xlu0 6
        %191 = vperm.xlu0 %190, %v137
        %v192 = vpop.permute.xlu0 %191
        %v194 = vsel %vm189, %v192, %v186
        %vm195 = vcmp.eq.s32.totalorder %v136, 7
        %v196 = vsel %vm195, 1, 0
        %vm197 = vcmp.eq.s32.totalorder %v196, 1
        %198 = vset.pattern.permute.xlu0 7
        %199 = vperm.xlu0 %198, %v137
        %v200 = vpop.permute.xlu0 %199
        %v202 = vsel %vm197, %v200, %v194
        %vm203 = vcmp.eq.s32.totalorder %v136, 8
        %v204 = vsel %vm203, 1, 0
        %vm205 = vcmp.eq.s32.totalorder %v204, 1
        %206 = vset.pattern.permute.xlu0 8
        %207 = vperm.xlu0 %206, %v137
        %v208 = vpop.permute.xlu0 %207
        %v210 = vsel %vm205, %v208, %v202
        %vm211 = vcmp.eq.s32.totalorder %v136, 9
        %v212 = vsel %vm211, 1, 0
        %vm213 = vcmp.eq.s32.totalorder %v212, 1
        %214 = vset.pattern.permute.xlu0 9
        %215 = vperm.xlu0 %214, %v137
        %v216 = vpop.permute.xlu0 %215
        %v218 = vsel %vm213, %v216, %v210
        %vm219 = vcmp.eq.s32.totalorder %v136, 10
        %v220 = vsel %vm219, 1, 0
        %vm221 = vcmp.eq.s32.totalorder %v220, 1
        %222 = vset.pattern.permute.xlu0 10
        %223 = vperm.xlu0 %222, %v137
        %v224 = vpop.permute.xlu0 %223
        %v226 = vsel %vm221, %v224, %v218
        %vm227 = vcmp.eq.s32.totalorder %v136, 11
        %v228 = vsel %vm227, 1, 0
        %vm229 = vcmp.eq.s32.totalorder %v228, 1
        %230 = vset.pattern.permute.xlu0 11
        %231 = vperm.xlu0 %230, %v137
        %v232 = vpop.permute.xlu0 %231
        %v234 = vsel %vm229, %v232, %v226
        %vm235 = vcmp.eq.s32.totalorder %v136, 12
        %v236 = vsel %vm235, 1, 0
        %vm237 = vcmp.eq.s32.totalorder %v236, 1
        %238 = vset.pattern.permute.xlu0 12
        %239 = vperm.xlu0 %238, %v137
        %v240 = vpop.permute.xlu0 %239
        %v242 = vsel %vm237, %v240, %v234
        %vm243 = vcmp.eq.s32.totalorder %v136, 13
        %v244 = vsel %vm243, 1, 0
        %vm245 = vcmp.eq.s32.totalorder %v244, 1
        %246 = vset.pattern.permute.xlu0 13
        %247 = vperm.xlu0 %246, %v137
        %v248 = vpop.permute.xlu0 %247
        %v250 = vsel %vm245, %v248, %v242
        %vm251 = vcmp.eq.s32.totalorder %v136, 14
        %v252 = vsel %vm251, 1, 0
        %vm253 = vcmp.eq.s32.totalorder %v252, 1
        %254 = vset.pattern.permute.xlu0 14
        %255 = vperm.xlu0 %254, %v137
        %v256 = vpop.permute.xlu0 %255
        %v258 = vsel %vm253, %v256, %v250
        %vm259 = vcmp.eq.s32.totalorder %v136, 15
        %v260 = vsel %vm259, 1, 0
        %vm261 = vcmp.eq.s32.totalorder %v260, 1
        %262 = vset.pattern.permute.xlu0 15
        %263 = vperm.xlu0 %262, %v137
        %v264 = vpop.permute.xlu0 %263
        %v266 = vsel %vm261, %v264, %v258
        %vm267 = vcmp.eq.s32.totalorder %v136, 16
        %v268 = vsel %vm267, 1, 0
        %vm269 = vcmp.eq.s32.totalorder %v268, 1
        %270 = vset.pattern.permute.xlu0 16
        %271 = vperm.xlu0 %270, %v137
        %v272 = vpop.permute.xlu0 %271
        %v274 = vsel %vm269, %v272, %v266
        %vm275 = vcmp.eq.s32.totalorder %v136, 17
        %v276 = vsel %vm275, 1, 0
        %vm277 = vcmp.eq.s32.totalorder %v276, 1
        %278 = vset.pattern.permute.xlu0 17
        %279 = vperm.xlu0 %278, %v137
        %v280 = vpop.permute.xlu0 %279
        %v282 = vsel %vm277, %v280, %v274
        %vm283 = vcmp.eq.s32.totalorder %v136, 18
        %v284 = vsel %vm283, 1, 0
        %vm285 = vcmp.eq.s32.totalorder %v284, 1
        %286 = vset.pattern.permute.xlu0 18
        %287 = vperm.xlu0 %286, %v137
        %v288 = vpop.permute.xlu0 %287
        %v290 = vsel %vm285, %v288, %v282
        %vm291 = vcmp.eq.s32.totalorder %v136, 19
        %v292 = vsel %vm291, 1, 0
        %vm293 = vcmp.eq.s32.totalorder %v292, 1
        %294 = vset.pattern.permute.xlu0 19
        %295 = vperm.xlu0 %294, %v137
        %v296 = vpop.permute.xlu0 %295
        %v298 = vsel %vm293, %v296, %v290
        %vm299 = vcmp.eq.s32.totalorder %v136, 20
        %v300 = vsel %vm299, 1, 0
        %vm301 = vcmp.eq.s32.totalorder %v300, 1
        %302 = vset.pattern.permute.xlu0 20
        %303 = vperm.xlu0 %302, %v137
        %v304 = vpop.permute.xlu0 %303
        %v306 = vsel %vm301, %v304, %v298
        %vm307 = vcmp.eq.s32.totalorder %v136, 21
        %v308 = vsel %vm307, 1, 0
        %vm309 = vcmp.eq.s32.totalorder %v308, 1
        %310 = vset.pattern.permute.xlu0 21
        %311 = vperm.xlu0 %310, %v137
        %v312 = vpop.permute.xlu0 %311
        %v314 = vsel %vm309, %v312, %v306
        %vm315 = vcmp.eq.s32.totalorder %v136, 22
        %v316 = vsel %vm315, 1, 0
        %vm317 = vcmp.eq.s32.totalorder %v316, 1
        %318 = vset.pattern.permute.xlu0 22
        %319 = vperm.xlu0 %318, %v137
        %v320 = vpop.permute.xlu0 %319
        %v322 = vsel %vm317, %v320, %v314
        %vm323 = vcmp.eq.s32.totalorder %v136, 23
        %v324 = vsel %vm323, 1, 0
        %vm325 = vcmp.eq.s32.totalorder %v324, 1
        %326 = vset.pattern.permute.xlu0 23
        %327 = vperm.xlu0 %326, %v137
        %v328 = vpop.permute.xlu0 %327
        %v330 = vsel %vm325, %v328, %v322
        %vm331 = vcmp.eq.s32.totalorder %v136, 24
        %v332 = vsel %vm331, 1, 0
        %vm333 = vcmp.eq.s32.totalorder %v332, 1
        %334 = vset.pattern.permute.xlu0 24
        %335 = vperm.xlu0 %334, %v137
        %v336 = vpop.permute.xlu0 %335
        %v338 = vsel %vm333, %v336, %v330
        %vm339 = vcmp.eq.s32.totalorder %v136, 25
        %v340 = vsel %vm339, 1, 0
        %vm341 = vcmp.eq.s32.totalorder %v340, 1
        %342 = vset.pattern.permute.xlu0 25
        %343 = vperm.xlu0 %342, %v137
        %v344 = vpop.permute.xlu0 %343
        %v346 = vsel %vm341, %v344, %v338
        %vm347 = vcmp.eq.s32.totalorder %v136, 26
        %v348 = vsel %vm347, 1, 0
        %vm349 = vcmp.eq.s32.totalorder %v348, 1
        %350 = vset.pattern.permute.xlu0 26
        %351 = vperm.xlu0 %350, %v137
        %v352 = vpop.permute.xlu0 %351
        %v354 = vsel %vm349, %v352, %v346
        %vm355 = vcmp.eq.s32.totalorder %v136, 27
        %v356 = vsel %vm355, 1, 0
        %vm357 = vcmp.eq.s32.totalorder %v356, 1
        %358 = vset.pattern.permute.xlu0 27
        %359 = vperm.xlu0 %358, %v137
        %v360 = vpop.permute.xlu0 %359
        %v362 = vsel %vm357, %v360, %v354
        %vm363 = vcmp.eq.s32.totalorder %v136, 28
        %v364 = vsel %vm363, 1, 0
        %vm365 = vcmp.eq.s32.totalorder %v364, 1
        %366 = vset.pattern.permute.xlu0 28
        %367 = vperm.xlu0 %366, %v137
        %v368 = vpop.permute.xlu0 %367
        %v370 = vsel %vm365, %v368, %v362
        %vm371 = vcmp.eq.s32.totalorder %v136, 29
        %v372 = vsel %vm371, 1, 0
        %vm373 = vcmp.eq.s32.totalorder %v372, 1
        %374 = vset.pattern.permute.xlu0 29
        %375 = vperm.xlu0 %374, %v137
        %v376 = vpop.permute.xlu0 %375
        %v378 = vsel %vm373, %v376, %v370
        %vm379 = vcmp.eq.s32.totalorder %v136, 30
        %v380 = vsel %vm379, 1, 0
        %vm381 = vcmp.eq.s32.totalorder %v380, 1
        %382 = vset.pattern.permute.xlu0 30
        %383 = vperm.xlu0 %382, %v137
        %v384 = vpop.permute.xlu0 %383
        %v386 = vsel %vm381, %v384, %v378
        %vm387 = vcmp.eq.s32.totalorder %v136, 31
        %v388 = vsel %vm387, 1, 0
        %vm389 = vcmp.eq.s32.totalorder %v388, 1
        %390 = vset.pattern.permute.xlu0 31
        %391 = vperm.xlu0 %390, %v137
        %v392 = vpop.permute.xlu0 %391
        %v394 = vsel %vm389, %v392, %v386
        %395 = vst [vmem:[#allocation2] sm:$0xff] %v394
        %v396 = vld [vmem:[#allocation2] sm:$0xff]
        %398 = vrot.lane.b32.xlu0 %v396, 121
        %v399 = vpop.permute.xlu0 %398
        %vm401 = vcmask 130048
        %402 = vst.msk [vmem:[%s107] sm:$0xff] %vm401, %v399
        %v403 = vld [vmem:[#allocation2] sm:$0xff]
        %405 = vrot.lane.b32.xlu0 %v403, 10
        %v406 = vpop.permute.xlu0 %405
        %vm408 = vcmask 261248
        %409 = vst.msk [vmem:[%s107] sm:$0xff] %vm408, %v406
        %v410 = vld [vmem:[#allocation2] sm:$0xff]
        %412 = vrot.lane.b32.xlu0 %v410, 27
        %v413 = vpop.permute.xlu0 %412
        %vm415 = vcmask 392448
        %416 = vst.msk [vmem:[%s107] sm:$0xff] %vm415, %v413
        %v417 = vld [vmem:[#allocation2] sm:$0xff]
        %419 = vrot.lane.b32.xlu0 %v417, 44
        %v420 = vpop.permute.xlu0 %419
        %vm422 = vcmask 523648
        %423 = vst.msk [vmem:[%s107] sm:$0xff] %vm422, %v420
        %v424 = vld [vmem:[#allocation2] sm:$0xff]
        %426 = vrot.lane.b32.xlu0 %v424, 61
        %v427 = vpop.permute.xlu0 %426
        %vm429 = vcmask 654848
        %430 = vst.msk [vmem:[%s107] sm:$0xff] %vm429, %v427
        %v431 = vld [vmem:[#allocation2] sm:$0xff]
        %433 = vrot.lane.b32.xlu0 %v431, 78
        %v434 = vpop.permute.xlu0 %433
        %vm436 = vcmask 786048
        %437 = vst.msk [vmem:[%s107] sm:$0xff] %vm436, %v434
        %v438 = vld [vmem:[#allocation2] sm:$0xff]
        %440 = vrot.lane.b32.xlu0 %v438, 95
        %v441 = vpop.permute.xlu0 %440
        %vm443 = vcmask 917248
        %444 = vst.msk [vmem:[%s107] sm:$0xff] %vm443, %v441
        %v445 = vld [vmem:[#allocation2] sm:$0xff]
        %447 = vrot.lane.b32.xlu0 %v445, 112
        %v448 = vpop.permute.xlu0 %447
        %vm450 = vcmask 1048448
        %451 = vst.msk [vmem:[%s107] sm:$0xff] %vm450, %v448
        %s452 = sand.u32 %s45, 1
        %s453 = scalar_lea.sflag [#allocation5], %s452
        %s454 = sand.u32 %s45, 1
        %s455 = smul.addr %s454, 8
        %s456 = scalar_lea.vmem [#allocation6], %s455
        // Predicated region
        $region29: #{tpu_custom_call.1} parent=23 // pred_check
          %p457 = pneg %p55
        $region30: #{tpu_custom_call.1} parent=23 // pred_check_branch
          %459 = sbr.rel (%p457) target = $region32
        $region31: #{tpu_custom_call.1} parent=23 // pred_region
          %s461 = ssub.s32 128, 128
          %462 = vsyncadd %s453, %s461
          %s463 = smul.addr %s16, 128
          %s464 = scalar_lea.hbm %s1, %s463
          %s466 = sshll.u32 %s456, 4
          %s467 = int_to_ptr.vmem [resolvable:$true] %s466
          %469 = dma.vmem_to_hbm [thread:$0]  %s467, 128, %s464, %s453
        $region32: #{tpu_custom_call.1} parent=23 // pred_fallthru
          _
      $region24: #{tpu_custom_call.1} parent=5 // pred_fallthru
        _
      %p470 = scmp.le.s32.totalorder 2, %s11
      // Predicated region
      $region33: #{tpu_custom_call.1} parent=5 // pred_check
        %p471 = pneg %p470
      $region34: #{tpu_custom_call.1} parent=5 // pred_check_branch
        %473 = sbr.rel (%p471) target = $region36
      $region35: #{tpu_custom_call.1} parent=5 // pred_region
        %s474 = ssub.s32 %s11, 2
        // Predicated region
        $region37: #{tpu_custom_call.1} parent=35 // pred_check
          %p475 = pneg %p61
        $region38: #{tpu_custom_call.1} parent=35 // pred_check_branch
          %477 = sbr.rel (%p475) target = $region40
        $region39: #{tpu_custom_call.1} parent=35 // pred_region
          %s478 = sand.u32 %s46, 1
          %s479 = scalar_lea.sflag [#allocation5], %s478
          %s480 = sand.u32 %s46, 1
          %s481 = smul.addr %s480, 8
          %s482 = scalar_lea.vmem [#allocation6], %s481
          %483 = dma.done %s479, 128
        $region40: #{tpu_custom_call.1} parent=35 // pred_fallthru
          _
      $region36: #{tpu_custom_call.1} parent=5 // pred_fallthru
        _
    $region6: #{tpu_custom_call.1} parent=1 // loop_footer
      %s15 = sadd.s32 1, %s11
    $region7: #{tpu_custom_call.1} parent=1 // loop_footer_branch
      %10 = sbr.rel target = $region3
    $region8: #{tpu_custom_call.1} parent=1 // loop_exit
      _
    %484 = vsyncpa [#allocation4], 1
    %s485 = scalar_lea.sflag [#allocation4], 1
    %486 = vsyncpa %s485, 1
    %487 = vsyncpa [#allocation5], 1
    %s488 = scalar_lea.sflag [#allocation5], 1
    %489 = vsyncpa %s488, 1

</llo_original>
